<compile_context>
chip_gen: v6e
topology: v6e:2x2x1
jax: 0.10.0
libtpu: 0.0.40
codegen_flags: <defaults>
</compile_context>

<pallas_src>
import functools

import jax
import jax.numpy as jnp
from jax import lax
from jax.experimental import pallas as pl
from jax.experimental.pallas import tpu as pltpu


def _round_up(a, b):
    return -(-a // b) * b


def _choose_tiles(nc, hw, itemsize, block_budget_bytes):
    """Pick (row_tile, hw_tile) for the flattened (NC, HW) input.

    Constraints honored:
      * input block (row_tile, hw_tile): row_tile % 8 == 0 (or == padded NC),
        hw_tile % 128 == 0 or hw_tile == HW.
      * output block (2, row_tile): row_tile % 128 == 0 unless there is a single
        row block (then it equals the full output lane dim).
      * one input block <= block_budget_bytes so the double-buffered pipeline sits
        comfortably inside scoped VMEM on v5e / v6e / v7x.
    """
    nc_pad = _round_up(nc, 8)
    target_rows = 512  # aim for big, DMA-efficient row tiles

    if target_rows * hw * itemsize <= block_budget_bytes or hw <= 128:
        hw_tile = hw  # full spatial extent per block
    else:
        cand = (block_budget_bytes // (target_rows * itemsize)) // 128 * 128
        hw_tile = min(max(128, cand), (hw // 128) * 128)

    rows_fit = (block_budget_bytes // (hw_tile * itemsize)) // 8 * 8
    row_tile = min(max(8, rows_fit), nc_pad, 2048)
    if row_tile >= nc_pad:
        row_tile = nc_pad                      # single row block -> full lane dim
    else:
        row_tile = max(128, (row_tile // 128) * 128)  # lane-dense out when >1 block
    return row_tile, hw_tile


def _mixed_pool_kernel(x_ref, out_ref, sum_ref, max_ref, *, hw, hw_tile, row_tile):
    # x_ref:   (row_tile, hw_tile) block of flattened (N*C, H*W) planes
    # out_ref: (2, row_tile) block — row 0 = mean, row 1 = max (lane-dense)
    # sum_ref / max_ref: (row_tile, 1) f32 VMEM running accumulators
    k = pl.program_id(1)

    @pl.when(k == 0)
    def _init():
        sum_ref[...] = jnp.zeros_like(sum_ref)
        max_ref[...] = jnp.full_like(max_ref, -jnp.inf)

    x = x_ref[...].astype(jnp.float32)

    if hw % hw_tile != 0:
        # Mask out-of-range spatial columns in the partial last HW block.
        col = k * hw_tile + lax.broadcasted_iota(jnp.int32, x.shape, 1)
        valid = col < hw
        x_sum = jnp.where(valid, x, 0.0)
        x_max = jnp.where(valid, x, -jnp.inf)
    else:
        x_sum = x
        x_max = x

    sum_ref[...] += jnp.sum(x_sum, axis=-1, keepdims=True)
    max_ref[...] = jnp.maximum(max_ref[...], jnp.max(x_max, axis=-1, keepdims=True))

    @pl.when(k == pl.num_programs(1) - 1)
    def _finalize():
        avg = sum_ref[...] * (1.0 / hw)           # (row_tile, 1)
        mx = max_ref[...]                         # (row_tile, 1)
        # Lane-dense stores: write each result as a full (1, row_tile) lane row.
        out_ref[0:1, :] = avg.reshape(1, row_tile).astype(out_ref.dtype)
        out_ref[1:2, :] = mx.reshape(1, row_tile).astype(out_ref.dtype)


def mixed_pooling(x, *, block_budget_bytes=4 * 1024 * 1024):
    """x: (N, C, H, W) -> (N, 2C, 1, 1)  (avg channels first, then max channels)."""
    N, C, H, W = x.shape
    NC, HW = N * C, H * W
    x_flat = x.reshape(NC, HW)

    row_tile, hw_tile = _choose_tiles(NC, HW, x.dtype.itemsize, block_budget_bytes)
    nt = pl.cdiv(NC, row_tile)
    kt = pl.cdiv(HW, hw_tile)

    kernel = functools.partial(
        _mixed_pool_kernel, hw=HW, hw_tile=hw_tile, row_tile=row_tile
    )

    out = pl.pallas_call(
        kernel,
        out_shape=jax.ShapeDtypeStruct((2, nt * row_tile), x.dtype),
        grid=(nt, kt),
        in_specs=[pl.BlockSpec((row_tile, hw_tile), lambda i, k: (i, k))],
        out_specs=pl.BlockSpec((2, row_tile), lambda i, k: (0, i)),
        scratch_shapes=[
            pltpu.VMEM((row_tile, 1), jnp.float32),  # running sum
            pltpu.VMEM((row_tile, 1), jnp.float32),  # running max
        ],
        compiler_params=pltpu.CompilerParams(
            dimension_semantics=("parallel", "arbitrary"),
            vmem_limit_bytes=32 * 1024 * 1024,  # raise v5e's 16 MiB default; OK on v7x
        ),
    )(x_flat)

    # Rows beyond NC in the last row block are in-bounds garbage -> slice them off.
    avg = out[0, :NC].reshape(N, C)
    mx = out[1, :NC].reshape(N, C)
    # cat((GAP, MP), dim=1): avg channels first, then max channels.
    return jnp.stack([avg, mx], axis=1).reshape(N, 2 * C, 1, 1)


def _reference(x):
    ref_gap = jnp.mean(x, axis=(2, 3), keepdims=True)
    ref_mp = jnp.max(x, axis=(2, 3), keepdims=True)
    return jnp.concatenate([ref_gap, ref_mp], axis=1)


if __name__ == "__main__":
    key0, key1 = jax.random.split(jax.random.PRNGKey(0))

    # Small shape consistent with the module.
    x = jax.random.normal(key0, (2, 4, 16, 16), dtype=jnp.float32)
    out = jax.block_until_ready(mixed_pooling(x))
    ref = _reference(x)
    assert out.shape == (2, 8, 1, 1), out.shape
    assert jnp.allclose(out, ref, atol=1e-5, rtol=1e-5), float(
        jnp.max(jnp.abs(out - ref))
    )

    # Second check with a tiny VMEM budget to exercise the tiled paths
    # (multiple row blocks, partial last row block, HW tiling + masking,
    #  multi-step accumulation).
    x2 = jax.random.normal(key1, (2, 160, 12, 12), dtype=jnp.float32)
    out2 = jax.block_until_ready(mixed_pooling(x2, block_budget_bytes=64 * 1024))
    ref2 = _reference(x2)
    assert out2.shape == (2, 320, 1, 1), out2.shape
    assert jnp.allclose(out2, ref2, atol=1e-5, rtol=1e-5), float(
        jnp.max(jnp.abs(out2 - ref2))
    )

    print("KERNEL_OK")
</pallas_src>

<mosaic_0001>
module attributes {stable_mosaic.version = 11 : i64} {
  func.func @_mixed_pool_kernel(%arg0: i32, %arg1: i32, %arg2: memref<8x256xf32, #tpu.memory_space<vmem>>, %arg3: memref<2x8xf32, #tpu.memory_space<vmem>>, %arg4: memref<8x1xf32, #tpu.memory_space<vmem>>, %arg5: memref<8x1xf32, #tpu.memory_space<vmem>>) attributes {dimension_semantics = [#tpu.dimension_semantics<parallel>, #tpu.dimension_semantics<arbitrary>], iteration_bounds = array<i64: 1, 1>, scalar_prefetch = 0 : i64, scratch_operands = 2 : i64, tpu.core_type = #tpu.core_type<tc>, window_params = [{transform_indices = @transform_0, window_bounds = array<i64: 8, 256>}, {transform_indices = @transform_1, window_bounds = array<i64: 2, 8>}]} {
    %c0_i32 = arith.constant 0 : i32
    %0 = arith.cmpi eq, %arg1, %c0_i32 : i32
    %1 = arith.extui %0 : i1 to i32
    %c0_i32_0 = arith.constant 0 : i32
    %2 = arith.cmpi ne, %1, %c0_i32_0 : i32
    scf.if %2 {
      %cst_13 = arith.constant 0.000000e+00 : f32
      %17 = vector.broadcast %cst_13 : f32 to vector<8x1xf32>
      %c0_14 = arith.constant 0 : index
      %c0_15 = arith.constant 0 : index
      %18 = vector.load %arg4[%c0_14, %c0_15] : memref<8x1xf32, #tpu.memory_space<vmem>>, vector<8x1xf32>
      tpu.vector_store %arg4[%c0_14, %c0_15], %17 {strides = array<i32>} : memref<8x1xf32, #tpu.memory_space<vmem>>, vector<8x1xf32>,
      %cst_16 = arith.constant 0xFF800000 : f32
      %19 = vector.broadcast %cst_16 : f32 to vector<8x1xf32>
      %c0_17 = arith.constant 0 : index
      %c0_18 = arith.constant 0 : index
      %20 = vector.load %arg5[%c0_17, %c0_18] : memref<8x1xf32, #tpu.memory_space<vmem>>, vector<8x1xf32>
      tpu.vector_store %arg5[%c0_17, %c0_18], %19 {strides = array<i32>} : memref<8x1xf32, #tpu.memory_space<vmem>>, vector<8x1xf32>,
    } else {
    }
    %c0 = arith.constant 0 : index
    %c0_1 = arith.constant 0 : index
    %3 = vector.load %arg2[%c0, %c0_1] : memref<8x256xf32, #tpu.memory_space<vmem>>, vector<8x256xf32>
    %c0_2 = arith.constant 0 : index
    %c0_3 = arith.constant 0 : index
    %4 = vector.load %arg4[%c0_2, %c0_3] : memref<8x1xf32, #tpu.memory_space<vmem>>, vector<8x1xf32>
    %cst = arith.constant dense<0.000000e+00> : vector<8xf32>
    %5 = vector.multi_reduction <add>, %3, %cst [1] : vector<8x256xf32> to vector<8xf32>
    %6 = vector.shape_cast %5 : vector<8xf32> to vector<8x1xf32>
    %7 = arith.addf %4, %6 : vector<8x1xf32>
    %c0_4 = arith.constant 0 : index
    %c0_5 = arith.constant 0 : index
    %8 = vector.load %arg4[%c0_4, %c0_5] : memref<8x1xf32, #tpu.memory_space<vmem>>, vector<8x1xf32>
    tpu.vector_store %arg4[%c0_4, %c0_5], %7 {strides = array<i32>} : memref<8x1xf32, #tpu.memory_space<vmem>>, vector<8x1xf32>,
    %c0_6 = arith.constant 0 : index
    %c0_7 = arith.constant 0 : index
    %9 = vector.load %arg5[%c0_6, %c0_7] : memref<8x1xf32, #tpu.memory_space<vmem>>, vector<8x1xf32>
    %cst_8 = arith.constant dense<0xFF800000> : vector<8xf32>
    %10 = vector.multi_reduction <maximumf>, %3, %cst_8 [1] : vector<8x256xf32> to vector<8xf32>
    %11 = vector.shape_cast %10 : vector<8xf32> to vector<8x1xf32>
    %12 = arith.maximumf %9, %11 : vector<8x1xf32>
    %c0_9 = arith.constant 0 : index
    %c0_10 = arith.constant 0 : index
    %13 = vector.load %arg5[%c0_9, %c0_10] : memref<8x1xf32, #tpu.memory_space<vmem>>, vector<8x1xf32>
    tpu.vector_store %arg5[%c0_9, %c0_10], %12 {strides = array<i32>} : memref<8x1xf32, #tpu.memory_space<vmem>>, vector<8x1xf32>,
    %c0_i32_11 = arith.constant 0 : i32
    %14 = arith.cmpi eq, %arg1, %c0_i32_11 : i32
    %15 = arith.extui %14 : i1 to i32
    %c0_i32_12 = arith.constant 0 : i32
    %16 = arith.cmpi ne, %15, %c0_i32_12 : i32
    scf.if %16 {
      %c0_13 = arith.constant 0 : index
      %c0_14 = arith.constant 0 : index
      %17 = vector.load %arg4[%c0_13, %c0_14] : memref<8x1xf32, #tpu.memory_space<vmem>>, vector<8x1xf32>
      %cst_15 = arith.constant 3.906250e-03 : f32
      %18 = vector.broadcast %cst_15 : f32 to vector<8x1xf32>
      %19 = arith.mulf %17, %18 : vector<8x1xf32>
      %c0_16 = arith.constant 0 : index
      %c0_17 = arith.constant 0 : index
      %20 = vector.load %arg5[%c0_16, %c0_17] : memref<8x1xf32, #tpu.memory_space<vmem>>, vector<8x1xf32>
      %21 = vector.shape_cast %19 : vector<8x1xf32> to vector<1x8xf32>
      %c0_18 = arith.constant 0 : index
      %c0_19 = arith.constant 0 : index
      %22 = vector.load %arg3[%c0_18, %c0_19] : memref<2x8xf32, #tpu.memory_space<vmem>>, vector<1x8xf32>
      tpu.vector_store %arg3[%c0_18, %c0_19], %21 {strides = array<i32>} : memref<2x8xf32, #tpu.memory_space<vmem>>, vector<1x8xf32>,
      %23 = vector.shape_cast %20 : vector<8x1xf32> to vector<1x8xf32>
      %c1 = arith.constant 1 : index
      %c0_20 = arith.constant 0 : index
      %24 = vector.load %arg3[%c1, %c0_20] : memref<2x8xf32, #tpu.memory_space<vmem>>, vector<1x8xf32>
      tpu.vector_store %arg3[%c1, %c0_20], %23 {strides = array<i32>} : memref<2x8xf32, #tpu.memory_space<vmem>>, vector<1x8xf32>,
    } else {
    }
    return
  }
  func.func @transform_0(%arg0: i32, %arg1: i32) -> (i32, i32) {
    %c0_i32 = arith.constant 0 : i32
    return %arg0, %arg1 : i32, i32
  }
  func.func @transform_1(%arg0: i32, %arg1: i32) -> (i32, i32) {
    %c0_i32 = arith.constant 0 : i32
    %c0_i32_0 = arith.constant 0 : i32
    return %c0_i32, %arg0 : i32, i32
  }
}

</mosaic_0001>

<llo_original>
// kernel: tpu_custom_call.1
$region0: #{tpu_custom_call.1}
  #allocation0 [shape = 'u32[]', space=smem, size = 0x4, offset = 0x4, fixed_abs, tag = 'smem constant byte address 0x4 - core index']
  #allocation1 [shape = 'u32[144,128]{1,0:T(1,128)}', space=vmem, size = 0x12000, scoped, tag = 'internal scratch']
  #allocation2 [shape = 'f32[8,1]{1,0:T(8,128)}', space=vmem, size = 0x1000, scoped, tag = 'scratch operand']
  #allocation3 [shape = 'f32[8,1]{1,0:T(8,128)}', space=vmem, size = 0x1000, scoped, tag = 'scratch operand']
  %s0 = inlined_call_operand.hbm [shape: f32[8,256], index: 0, kind: input, shape index: {}]
  %s1 = inlined_call_operand.hbm [shape: f32[2,8], index: 1, kind: output, shape index: {}]
  %s2 = sld [smem:[#allocation0]]
  $region26: #{tpu_custom_call.1} parent=0
    _
  %s4 = ssub.s32 1, %s2
  %s5 = scalar_select 0, %s4, %s2
  $region1: #{tpu_custom_call.1} parent=0
    #allocation4 [shape = 'u8[8192]{0}', space=vmem, size = 0x2000, scoped, tag = 'input window, operand 0, single buffered']
    #allocation5 [shape = 's32[1]{0}', space=sflag, size = 0x4, scoped, tag = 'scoped memory for tpu_custom_call.1']
    #allocation6 [shape = 's32[1]{0}', space=sflag, size = 0x4, scoped, tag = 'scoped memory for tpu_custom_call.1']
    #allocation7 [shape = 'u8[1024]{0}', space=vmem, size = 0x400, scoped, tag = 'output window, operand 0, single buffered']
    %6 = vsyncpa [#allocation5], 0
    %7 = vsyncpa [#allocation6], 0
    // Predicated region
    $region2: #{tpu_custom_call.1} parent=1 // pred_check
      _
    $region3: #{tpu_custom_call.1} parent=1 // pred_check_branch
      %9 = sbr.rel (0) target = $region5
    $region4: #{tpu_custom_call.1} parent=1 // pred_region
      %s11 = ssub.s32 256, 256
      %12 = vsyncadd [#allocation5], %s11
      %s14 = sshll.u32 [#allocation4], 4
      %s15 = int_to_ptr.vmem [resolvable:$true] %s14
      %17 = dma.hbm_to_vmem [thread:$0]  %s0, 256, %s15, [#allocation5]
    $region5: #{tpu_custom_call.1} parent=1 // pred_fallthru
      _
    // Predicated region
    $region6: #{tpu_custom_call.1} parent=1 // pred_check
      _
    $region7: #{tpu_custom_call.1} parent=1 // pred_check_branch
      %19 = sbr.rel (0) target = $region9
    $region8: #{tpu_custom_call.1} parent=1 // pred_region
      %20 = dma.done [#allocation5], 256
    $region9: #{tpu_custom_call.1} parent=1 // pred_fallthru
      _
    %p21 = scmp.eq.s32.totalorder 0, 0
    // Predicated region
    $region10: #{tpu_custom_call.1} parent=1 // pred_check
      %p22 = pneg %p21
    $region11: #{tpu_custom_call.1} parent=1 // pred_check_branch
      %24 = sbr.rel (%p22) target = $region13
    $region12: #{tpu_custom_call.1} parent=1 // pred_region
      %vm25 = vcmask 7168
      %26 = vst.msk [vmem:[#allocation2] sm:$0xff] %vm25, 0.0
      %27 = vst.msk [vmem:[#allocation3] sm:$0xff] %vm25, -inf
    $region13: #{tpu_custom_call.1} parent=1 // pred_fallthru
      _
    %v28 = vld [vmem:[#allocation4] sm:$0xff]
    %v29 = vld [vmem:[#allocation4 + $0x8] sm:$0xff]
    %v30 = vld [vmem:[#allocation2] sm:$0xff]
    %v31 = vadd.f32 %v28, %v29
    %32 = vadd.xlane.f32.xlu0 %v31
    %v33 = vpop.xlane.xlu0 %32
    %v34 = vadd.f32 %v30, %v33
    %vm35 = vcmask 7168
    %36 = vst.msk [vmem:[#allocation2] sm:$0xff] %vm35, %v34
    %v37 = vld [vmem:[#allocation3] sm:$0xff]
    %v38 = vmax.f32 %v28, %v29
    %39 = vmax.xlane.f32.xlu0 %v38
    %v40 = vpop.xlane.xlu0 %39
    %v41 = vmax.f32 %v37, %v40
    %42 = vst.msk [vmem:[#allocation3] sm:$0xff] %vm35, %v41
    // Predicated region
    $region14: #{tpu_custom_call.1} parent=1 // pred_check
      %p43 = pneg %p21
    $region15: #{tpu_custom_call.1} parent=1 // pred_check_branch
      %45 = sbr.rel (%p43) target = $region17
    $region16: #{tpu_custom_call.1} parent=1 // pred_region
      %v46 = vld [vmem:[#allocation2] sm:$0xff]
      %v47 = vmul.f32 %v46, 0.00390625
      %v48 = vld [vmem:[#allocation3] sm:$0xff]
      %50 = vset.pattern.permute.xlu0 0
      %51 = vperm.xlu0 %50, %v47
      %v52 = vpop.permute.xlu0 %51
      %v53 = vlaneseq
      %v54 = vand.u32 %v53, 127
      %v55 = vlaneseq
      %v56 = vshrl.u32 %v55, 7
      %v57 = vsub.s32 %v54, %v56
      %v58 = vrot.slane %v52, %v57
      %vm60 = vcmask 57344
      %61 = vst.msk [vmem:[#allocation7] sm:$0x1] %vm60, %v58
      %63 = vset.pattern.permute.xlu0 0
      %64 = vperm.xlu0 %63, %v48
      %v65 = vpop.permute.xlu0 %64
      %v66 = vlaneseq
      %v67 = vshrl.u32 %v66, 7
      %v68 = vsub.s32 %v54, %v67
      %v69 = vrot.slane %v65, %v68
      %71 = vst.msk [vmem:[#allocation7 + $0x1] sm:$0x1] %vm60, %v69
    $region17: #{tpu_custom_call.1} parent=1 // pred_fallthru
      _
    // Predicated region
    $region18: #{tpu_custom_call.1} parent=1 // pred_check
      _
    $region19: #{tpu_custom_call.1} parent=1 // pred_check_branch
      %73 = sbr.rel (0) target = $region21
    $region20: #{tpu_custom_call.1} parent=1 // pred_region
      %s75 = ssub.s32 32, 32
      %76 = vsyncadd [#allocation6], %s75
      %s78 = sshll.u32 [#allocation7], 4
      %s79 = int_to_ptr.vmem [resolvable:$true] %s78
      %81 = dma.vmem_to_hbm [thread:$0]  %s79, 32, %s1, [#allocation6]
    $region21: #{tpu_custom_call.1} parent=1 // pred_fallthru
      _
    // Predicated region
    $region22: #{tpu_custom_call.1} parent=1 // pred_check
      _
    $region23: #{tpu_custom_call.1} parent=1 // pred_check_branch
      %83 = sbr.rel (0) target = $region25
    $region24: #{tpu_custom_call.1} parent=1 // pred_region
      %84 = dma.done [#allocation6], 32
    $region25: #{tpu_custom_call.1} parent=1 // pred_fallthru
      _
    %85 = vsyncpa [#allocation5], 1
    %86 = vsyncpa [#allocation6], 1

</llo_original>
